<compile_context>
chip_gen: v7x
topology: tpu7x:2x2x1
jax: 0.10.0
libtpu: 0.0.40
codegen_flags: <defaults>
</compile_context>

<pallas_src>
import functools

import jax
import jax.numpy as jnp
from jax import lax
from jax.experimental import pallas as pl
from jax.experimental.pallas import tpu as pltpu

LANES = 128
MAX_BLOCK_ROWS = 8192          # 8192 x 128 x 4B = 4 MiB per f32 input block
NUM_SLICES = 2                 # leading "parallel" grid axis (2 TCs on v7x)
VMEM_LIMIT_BYTES = 48 << 20    # 2 inputs x 2 buffers x 4 MiB + slack; < 64 MiB


def _round_up(x, m):
    return ((x + m - 1) // m) * m


def _sublane_align(dtype):
    # f32 -> 8 sublanes, bf16/f16 -> 16, int8/bool -> 32 (packed layouts).
    return max(8, 32 // jnp.dtype(dtype).itemsize)


def _pow(x, gamma):
    """x ** gamma; repeated multiplies for non-negative integer gamma (VPU)."""
    if isinstance(gamma, int) and gamma >= 0:
        if gamma == 0:
            return jnp.ones_like(x)
        result, base, g = None, x, gamma
        while g:
            if g & 1:
                result = base if result is None else result * base
            g >>= 1
            if g:
                base = base * base
        return result
    return jnp.power(x, gamma)  # non-integer gamma -> EUP exp/log path


def _dice_sums_kernel(p_ref, t_ref, out_ref, *, gamma, blocks_per_slice,
                      block_rows, sub_rows, rows_total, has_boundary):
    """Accumulate lane-dense partials of [p*t, p**g, t**g] into out_ref.

    out_ref block is (1, 3, 8, LANES) f32 and stays resident across the
    second (reduction) grid axis.  The input block is streamed through vregs
    in `sub_rows`-row chunks and folded into three register-resident (8,128)
    accumulators -- no block-sized temporaries are materialized in VMEM.
    """
    c = pl.program_id(0)
    i = pl.program_id(1)

    @pl.when(i == 0)
    def _():
        out_ref[...] = jnp.zeros_like(out_ref)

    g = c * blocks_per_slice + i          # global (possibly phantom) block idx
    n_chunks = block_rows // sub_rows

    def fold(x):                          # (sub_rows, LANES) -> (8, LANES)
        if sub_rows == 8:
            return x
        return jnp.sum(x.reshape(sub_rows // 8, 8, LANES), axis=0)

    def chunk_terms(k):
        r0 = pl.multiple_of(k * sub_rows, sub_rows)
        p = p_ref[pl.ds(r0, sub_rows), :].astype(jnp.float32)
        t = t_ref[pl.ds(r0, sub_rows), :].astype(jnp.float32)
        return p * t, _pow(p, gamma), _pow(t, gamma)

    def accumulate(acc, terms):
        a_pt, a_pp, a_tp = acc
        pt, pp, tp = terms
        return a_pt + fold(pt), a_pp + fold(pp), a_tp + fold(tp)

    def write_out(acc):
        a_pt, a_pp, a_tp = acc
        out_ref[0, 0, :, :] += a_pt
        out_ref[0, 1, :, :] += a_pp
        out_ref[0, 2, :, :] += a_tp

    def zeros3():
        return tuple(jnp.zeros((8, LANES), jnp.float32) for _ in range(3))

    def fast_path():
        # Interior block: no masking, ~6 VPU ops per vreg.
        def body(k, acc):
            return accumulate(acc, chunk_terms(k))
        unroll = True if n_chunks <= 8 else 4
        write_out(lax.fori_loop(0, n_chunks, body, zeros3(), unroll=unroll))

    def masked_path():
        # Boundary or phantom block: mask rows >= remaining valid rows with a
        # block-local compare (no global element index -> no int32 overflow).
        valid = jnp.clip(rows_total - g * block_rows, 0, block_rows)
        row = lax.broadcasted_iota(jnp.int32, (sub_rows, LANES), 0)

        def body(k, acc):
            pt, pp, tp = chunk_terms(k)
            m = (row + k * sub_rows) < valid
            # Mask AFTER the power: garbage rows from a partial/phantom DMA
            # may transiently yield NaN/Inf for non-integer gamma, but
            # jnp.where discards them (numerically harmless).
            return accumulate(acc, (jnp.where(m, pt, 0.0),
                                    jnp.where(m, pp, 0.0),
                                    jnp.where(m, tp, 0.0)))

        write_out(lax.fori_loop(0, n_chunks, body, zeros3()))

    if has_boundary:
        is_full = (g + 1) * block_rows <= rows_total
        pl.when(is_full)(fast_path)
        pl.when(jnp.logical_not(is_full))(masked_path)
    else:
        fast_path()


def dice_loss(y_pred, y_true, smooth=1e-6, gamma=2):
    """JAX/Pallas equivalent of DiceLoss.forward (returns a scalar float32)."""
    n = int(y_pred.size)
    p = jnp.ravel(y_pred)
    t = jnp.ravel(y_true)

    rows = n // LANES
    tail = n - rows * LANES

    # <128-element lane tail is summed with plain JAX (reads only `tail`
    # elements) so we never jnp.pad (and re-copy) both full inputs.
    if tail:
        p_tail = lax.slice(p, (rows * LANES,), (n,)).astype(jnp.float32)
        t_tail = lax.slice(t, (rows * LANES,), (n,)).astype(jnp.float32)
        tail_sums = jnp.stack([jnp.sum(p_tail * t_tail),
                               jnp.sum(_pow(p_tail, gamma)),
                               jnp.sum(_pow(t_tail, gamma))])
    else:
        tail_sums = jnp.zeros((3,), jnp.float32)

    if rows == 0:
        sums = tail_sums
    else:
        if tail:
            # TODO(synk): this prefix slice is one extra HBM copy in the
            # rare unaligned case; the aligned case stays copy-free.
            p = lax.slice(p, (0,), (rows * LANES,))
            t = lax.slice(t, (0,), (rows * LANES,))
        p2 = p.reshape(rows, LANES)
        t2 = t.reshape(rows, LANES)

        align = max(_sublane_align(p2.dtype), _sublane_align(t2.dtype))
        block_rows = min(MAX_BLOCK_ROWS, _round_up(rows, align))
        nb = pl.cdiv(rows, block_rows)                 # total row-blocks
        num_slices = NUM_SLICES if nb >= NUM_SLICES else 1
        nbc = pl.cdiv(nb, num_slices)                  # blocks per slice
        has_boundary = (num_slices * nbc * block_rows) != rows
        sub_rows = max(s for s in (64, 32, 16, 8) if block_rows % s == 0)

        def in_map(c, i):
            # Clamp so a phantom block (when num_slices doesn't divide nb)
            # never issues a fully-OOB DMA; its rows are masked in-kernel.
            return (jnp.minimum(c * nbc + i, nb - 1), 0)

        kernel = functools.partial(
            _dice_sums_kernel, gamma=gamma, blocks_per_slice=nbc,
            block_rows=block_rows, sub_rows=sub_rows, rows_total=rows,
            has_boundary=has_boundary)

        is_int_gamma = isinstance(gamma, int)
        cost = pl.CostEstimate(
            flops=6 * rows * LANES,
            transcendentals=0 if is_int_gamma else 2 * rows * LANES,
            bytes_accessed=rows * LANES * (p2.dtype.itemsize
                                           + t2.dtype.itemsize)
            + num_slices * 3 * 8 * LANES * 4)

        partials = pl.pallas_call(
            kernel,
            out_shape=jax.ShapeDtypeStruct((num_slices, 3, 8, LANES),
                                           jnp.float32),
            grid=(num_slices, nbc),
            in_specs=[
                pl.BlockSpec((block_rows, LANES), in_map),
                pl.BlockSpec((block_rows, LANES), in_map),
            ],
            # One resident lane-dense accumulator block per slice (per core).
            out_specs=pl.BlockSpec((1, 3, 8, LANES), lambda c, i: (c, 0, 0, 0)),
            compiler_params=pltpu.CompilerParams(
                # TODO(synk): verify on v7x that "parallel" on the size-2 axis
                # actually shards the grid across both TensorCores; if not,
                # switch to pltpu.CORE_PARALLEL / pl.core_map.
                dimension_semantics=("parallel", "arbitrary"),
                vmem_limit_bytes=VMEM_LIMIT_BYTES),
            cost_estimate=cost,
        )(p2, t2)

        sums = jnp.sum(partials, axis=(0, 2, 3)) + tail_sums

    intersection = sums[0]
    denominator = sums[1] + sums[2]
    dice_score = (2.0 * intersection + smooth) / (denominator + smooth)
    return (1.0 - dice_score).astype(jnp.float32)


def _dice_loss_ref(y_pred, y_true, smooth=1e-6, gamma=2):
    """Pure-JAX reference mirroring the PyTorch module exactly."""
    p = jnp.ravel(y_pred).astype(jnp.float32)
    t = jnp.ravel(y_true).astype(jnp.float32)
    intersection = jnp.sum(p * t)
    denominator = jnp.sum(jnp.power(p, gamma)) + jnp.sum(jnp.power(t, gamma))
    dice_score = (2.0 * intersection + smooth) / (denominator + smooth)
    return 1.0 - dice_score


if __name__ == "__main__":
    key = jax.random.PRNGKey(0)
    k1, k2 = jax.random.split(key)

    # Shapes consistent with a segmentation use-case: (batch, channels, H, W).
    y_pred = jax.nn.sigmoid(jax.random.normal(k1, (2, 4, 16, 16),
                                              dtype=jnp.float32))
    y_true = (jax.random.uniform(k2, (2, 4, 16, 16)) > 0.5).astype(jnp.float32)

    loss = jax.block_until_ready(dice_loss(y_pred, y_true))
    ref = jax.block_until_ready(_dice_loss_ref(y_pred, y_true))
    assert jnp.allclose(loss, ref, rtol=1e-5, atol=1e-6), (loss, ref)

    # Exercise the boundary-masked block + lane-tail (unaligned) path as well.
    k3, k4 = jax.random.split(k1)
    yp2 = jax.nn.sigmoid(jax.random.normal(k3, (3, 5, 37, 41),
                                           dtype=jnp.float32))
    yt2 = (jax.random.uniform(k4, (3, 5, 37, 41)) > 0.5).astype(jnp.float32)
    loss2 = jax.block_until_ready(dice_loss(yp2, yt2))
    ref2 = jax.block_until_ready(_dice_loss_ref(yp2, yt2))
    assert jnp.allclose(loss2, ref2, rtol=1e-5, atol=1e-6), (loss2, ref2)

    print("KERNEL_OK")
</pallas_src>

<mosaic_0001>
module attributes {stable_mosaic.version = 11 : i64} {
  func.func @_dice_sums_kernel(%arg0: i32, %arg1: i32, %arg2: memref<16x128xf32, #tpu.memory_space<vmem>>, %arg3: memref<16x128xf32, #tpu.memory_space<vmem>>, %arg4: memref<1x3x8x128xf32, #tpu.memory_space<vmem>>) attributes {dimension_semantics = [#tpu.dimension_semantics<parallel>, #tpu.dimension_semantics<arbitrary>], iteration_bounds = array<i64: 1, 1>, scalar_prefetch = 0 : i64, scratch_operands = 0 : i64, tpu.core_type = #tpu.core_type<tc>, window_params = [{transform_indices = @transform_0, window_bounds = array<i64: 16, 128>}, {transform_indices = @transform_1, window_bounds = array<i64: 16, 128>}, {transform_indices = @transform_2, window_bounds = array<i64: 1, 3, 8, 128>}]} {
    %c0_i32 = arith.constant 0 : i32
    %0 = arith.cmpi eq, %arg1, %c0_i32 : i32
    %1 = arith.extui %0 : i1 to i32
    %c0_i32_0 = arith.constant 0 : i32
    %2 = arith.cmpi ne, %1, %c0_i32_0 : i32
    scf.if %2 {
      %cst_30 = arith.constant 0.000000e+00 : f32
      %42 = vector.broadcast %cst_30 : f32 to vector<1x3x8x128xf32>
      %c0_31 = arith.constant 0 : index
      %c0_32 = arith.constant 0 : index
      %c0_33 = arith.constant 0 : index
      %c0_34 = arith.constant 0 : index
      %43 = vector.load %arg4[%c0_31, %c0_32, %c0_33, %c0_34] : memref<1x3x8x128xf32, #tpu.memory_space<vmem>>, vector<1x3x8x128xf32>
      tpu.vector_store %arg4[%c0_31, %c0_32, %c0_33, %c0_34], %42 {strides = array<i32>} : memref<1x3x8x128xf32, #tpu.memory_space<vmem>>, vector<1x3x8x128xf32>,
    } else {
    }
    %cst = arith.constant 0.000000e+00 : f32
    %3 = vector.broadcast %cst : f32 to vector<8x128xf32>
    %cst_1 = arith.constant 0.000000e+00 : f32
    %4 = vector.broadcast %cst_1 : f32 to vector<8x128xf32>
    %cst_2 = arith.constant 0.000000e+00 : f32
    %5 = vector.broadcast %cst_2 : f32 to vector<8x128xf32>
    %c0_i32_3 = arith.constant 0 : i32
    %c16_i32 = arith.constant 16 : i32
    %6 = arith.muli %c0_i32_3, %c16_i32 : i32
    %7 = tpu.assume_multiple %6, 16 : i32
    %8 = arith.index_cast %7 : i32 to index
    %c0 = arith.constant 0 : index
    %9 = vector.load %arg2[%8, %c0] : memref<16x128xf32, #tpu.memory_space<vmem>>, vector<16x128xf32>
    %10 = arith.index_cast %7 : i32 to index
    %c0_4 = arith.constant 0 : index
    %11 = vector.load %arg3[%10, %c0_4] : memref<16x128xf32, #tpu.memory_space<vmem>>, vector<16x128xf32>
    %12 = arith.mulf %9, %11 : vector<16x128xf32>
    %13 = arith.mulf %9, %9 : vector<16x128xf32>
    %14 = arith.mulf %11, %11 : vector<16x128xf32>
    %15 = vector.shape_cast %12 : vector<16x128xf32> to vector<2x8x128xf32>
    %cst_5 = arith.constant dense<0.000000e+00> : vector<8x128xf32>
    %16 = vector.multi_reduction <add>, %15, %cst_5 [0] : vector<2x8x128xf32> to vector<8x128xf32>
    %17 = arith.addf %3, %16 : vector<8x128xf32>
    %18 = vector.shape_cast %13 : vector<16x128xf32> to vector<2x8x128xf32>
    %cst_6 = arith.constant dense<0.000000e+00> : vector<8x128xf32>
    %19 = vector.multi_reduction <add>, %18, %cst_6 [0] : vector<2x8x128xf32> to vector<8x128xf32>
    %20 = arith.addf %4, %19 : vector<8x128xf32>
    %21 = vector.shape_cast %14 : vector<16x128xf32> to vector<2x8x128xf32>
    %cst_7 = arith.constant dense<0.000000e+00> : vector<8x128xf32>
    %22 = vector.multi_reduction <add>, %21, %cst_7 [0] : vector<2x8x128xf32> to vector<8x128xf32>
    %23 = arith.addf %5, %22 : vector<8x128xf32>
    %c1_i32 = arith.constant 1 : i32
    %c0_8 = arith.constant 0 : index
    %c0_9 = arith.constant 0 : index
    %c0_10 = arith.constant 0 : index
    %c0_11 = arith.constant 0 : index
    %24 = vector.load %arg4[%c0_8, %c0_9, %c0_10, %c0_11] : memref<1x3x8x128xf32, #tpu.memory_space<vmem>>, vector<1x1x8x128xf32>
    %25 = vector.shape_cast %24 : vector<1x1x8x128xf32> to vector<8x128xf32>
    %26 = arith.addf %25, %17 : vector<8x128xf32>
    %c0_12 = arith.constant 0 : index
    %c0_13 = arith.constant 0 : index
    %c0_14 = arith.constant 0 : index
    %c0_15 = arith.constant 0 : index
    %27 = vector.load %arg4[%c0_12, %c0_13, %c0_14, %c0_15] : memref<1x3x8x128xf32, #tpu.memory_space<vmem>>, vector<1x1x8x128xf32>
    %28 = vector.shape_cast %27 : vector<1x1x8x128xf32> to vector<8x128xf32>
    %29 = vector.shape_cast %26 : vector<8x128xf32> to vector<1x1x8x128xf32>
    tpu.vector_store %arg4[%c0_12, %c0_13, %c0_14, %c0_15], %29 {strides = array<i32>} : memref<1x3x8x128xf32, #tpu.memory_space<vmem>>, vector<1x1x8x128xf32>,
    %c0_16 = arith.constant 0 : index
    %c1 = arith.constant 1 : index
    %c0_17 = arith.constant 0 : index
    %c0_18 = arith.constant 0 : index
    %30 = vector.load %arg4[%c0_16, %c1, %c0_17, %c0_18] : memref<1x3x8x128xf32, #tpu.memory_space<vmem>>, vector<1x1x8x128xf32>
    %31 = vector.shape_cast %30 : vector<1x1x8x128xf32> to vector<8x128xf32>
    %32 = arith.addf %31, %20 : vector<8x128xf32>
    %c0_19 = arith.constant 0 : index
    %c1_20 = arith.constant 1 : index
    %c0_21 = arith.constant 0 : index
    %c0_22 = arith.constant 0 : index
    %33 = vector.load %arg4[%c0_19, %c1_20, %c0_21, %c0_22] : memref<1x3x8x128xf32, #tpu.memory_space<vmem>>, vector<1x1x8x128xf32>
    %34 = vector.shape_cast %33 : vector<1x1x8x128xf32> to vector<8x128xf32>
    %35 = vector.shape_cast %32 : vector<8x128xf32> to vector<1x1x8x128xf32>
    tpu.vector_store %arg4[%c0_19, %c1_20, %c0_21, %c0_22], %35 {strides = array<i32>} : memref<1x3x8x128xf32, #tpu.memory_space<vmem>>, vector<1x1x8x128xf32>,
    %c0_23 = arith.constant 0 : index
    %c2 = arith.constant 2 : index
    %c0_24 = arith.constant 0 : index
    %c0_25 = arith.constant 0 : index
    %36 = vector.load %arg4[%c0_23, %c2, %c0_24, %c0_25] : memref<1x3x8x128xf32, #tpu.memory_space<vmem>>, vector<1x1x8x128xf32>
    %37 = vector.shape_cast %36 : vector<1x1x8x128xf32> to vector<8x128xf32>
    %38 = arith.addf %37, %23 : vector<8x128xf32>
    %c0_26 = arith.constant 0 : index
    %c2_27 = arith.constant 2 : index
    %c0_28 = arith.constant 0 : index
    %c0_29 = arith.constant 0 : index
    %39 = vector.load %arg4[%c0_26, %c2_27, %c0_28, %c0_29] : memref<1x3x8x128xf32, #tpu.memory_space<vmem>>, vector<1x1x8x128xf32>
    %40 = vector.shape_cast %39 : vector<1x1x8x128xf32> to vector<8x128xf32>
    %41 = vector.shape_cast %38 : vector<8x128xf32> to vector<1x1x8x128xf32>
    tpu.vector_store %arg4[%c0_26, %c2_27, %c0_28, %c0_29], %41 {strides = array<i32>} : memref<1x3x8x128xf32, #tpu.memory_space<vmem>>, vector<1x1x8x128xf32>,
    return
  }
  func.func @transform_0(%arg0: i32, %arg1: i32) -> (i32, i32) {
    %c1_i32 = arith.constant 1 : i32
    %0 = arith.muli %arg0, %c1_i32 : i32
    %1 = arith.addi %0, %arg1 : i32
    %c0_i32 = arith.constant 0 : i32
    %2 = arith.minsi %1, %c0_i32 : i32
    %c0_i32_0 = arith.constant 0 : i32
    %c0_i32_1 = arith.constant 0 : i32
    return %2, %c0_i32_0 : i32, i32
  }
  func.func @transform_1(%arg0: i32, %arg1: i32) -> (i32, i32) {
    %c1_i32 = arith.constant 1 : i32
    %0 = arith.muli %arg0, %c1_i32 : i32
    %1 = arith.addi %0, %arg1 : i32
    %c0_i32 = arith.constant 0 : i32
    %2 = arith.minsi %1, %c0_i32 : i32
    %c0_i32_0 = arith.constant 0 : i32
    %c0_i32_1 = arith.constant 0 : i32
    return %2, %c0_i32_0 : i32, i32
  }
  func.func @transform_2(%arg0: i32, %arg1: i32) -> (i32, i32, i32, i32) {
    %c0_i32 = arith.constant 0 : i32
    %c0_i32_0 = arith.constant 0 : i32
    %c0_i32_1 = arith.constant 0 : i32
    %c0_i32_2 = arith.constant 0 : i32
    return %arg0, %c0_i32, %c0_i32_0, %c0_i32_1 : i32, i32, i32, i32
  }
}

</mosaic_0001>

<llo_original>
// kernel: tpu_custom_call.1
$region0: #{tpu_custom_call.1}
  #allocation0 [shape = 'u32[]', space=smem, size = 0x4, offset = 0x4, fixed_abs, tag = 'smem constant byte address 0x4 - core index']
  #allocation1 [shape = 'u32[144,128]{1,0:T(1,128)}', space=vmem, size = 0x12000, scoped, tag = 'internal scratch']
  %s0 = inlined_call_operand.hbm [shape: f32[16,128], index: 0, kind: input, shape index: {}]
  %s1 = inlined_call_operand.hbm [shape: f32[16,128], index: 1, kind: input, shape index: {}]
  %s2 = inlined_call_operand.hbm [shape: f32[1,3,8,128], index: 2, kind: output, shape index: {}]
  %s3 = sld [smem:[#allocation0]]
  $region30: #{tpu_custom_call.1} parent=0
    _
  %s5 = ssub.s32 1, %s3
  %s6 = scalar_select 0, %s5, %s3
  $region1: #{tpu_custom_call.1} parent=0
    #allocation2 [shape = 'u8[8192]{0}', space=vmem, size = 0x2000, scoped, tag = 'input window, operand 0, single buffered']
    #allocation3 [shape = 's32[1]{0}', space=sflag, size = 0x4, scoped, tag = 'scoped memory for tpu_custom_call.1']
    #allocation4 [shape = 's32[1]{0}', space=sflag, size = 0x4, scoped, tag = 'scoped memory for tpu_custom_call.1']
    #allocation5 [shape = 'u8[8192]{0}', space=vmem, size = 0x2000, scoped, tag = 'input window, operand 1, single buffered']
    #allocation6 [shape = 's32[1]{0}', space=sflag, size = 0x4, scoped, tag = 'scoped memory for tpu_custom_call.1']
    #allocation7 [shape = 'u8[12288]{0}', space=vmem, size = 0x3000, scoped, tag = 'output window, operand 0, single buffered']
    %7 = vsyncpa [#allocation3], 0
    %8 = vsyncpa [#allocation6], 0
    %9 = vsyncpa [#allocation4], 0
    // Predicated region
    $region2: #{tpu_custom_call.1} parent=1 // pred_check
      _
    $region3: #{tpu_custom_call.1} parent=1 // pred_check_branch
      %11 = sbr.rel (0) target = $region5
    $region4: #{tpu_custom_call.1} parent=1 // pred_region
      %s12 = sadd.s32 0, 0
      %p13 = scmp.lt.s32.totalorder %s12, 0
      %s14 = scalar_select %p13, %s12, 0
      %s15 = smul.u32 2, %s14
      %s17 = ssub.s32 256, 256
      %18 = vsyncadd [#allocation3], %s17
      %s19 = smul.addr %s15, 128
      %s20 = scalar_lea.hbm %s0, %s19
      %s21 = sshll.u32 [#allocation2], 4
      %s22 = int_to_ptr.vmem [resolvable:$true] %s21
      %27 = dma.hbm_to_vmem [thread:$0]  %s20, 256, %s22, [#allocation3], 128, 128, 8
    $region5: #{tpu_custom_call.1} parent=1 // pred_fallthru
      _
    // Predicated region
    $region6: #{tpu_custom_call.1} parent=1 // pred_check
      _
    $region7: #{tpu_custom_call.1} parent=1 // pred_check_branch
      %29 = sbr.rel (0) target = $region9
    $region8: #{tpu_custom_call.1} parent=1 // pred_region
      %s30 = sadd.s32 0, 0
      %p31 = scmp.lt.s32.totalorder %s30, 0
      %s32 = scalar_select %p31, %s30, 0
      %s33 = smul.u32 2, %s32
      %s35 = ssub.s32 256, 256
      %36 = vsyncadd [#allocation6], %s35
      %s37 = smul.addr %s33, 128
      %s38 = scalar_lea.hbm %s1, %s37
      %s39 = sshll.u32 [#allocation5], 4
      %s40 = int_to_ptr.vmem [resolvable:$true] %s39
      %45 = dma.hbm_to_vmem [thread:$0]  %s38, 256, %s40, [#allocation6], 128, 128, 8
    $region9: #{tpu_custom_call.1} parent=1 // pred_fallthru
      _
    // Predicated region
    $region10: #{tpu_custom_call.1} parent=1 // pred_check
      _
    $region11: #{tpu_custom_call.1} parent=1 // pred_check_branch
      %47 = sbr.rel (0) target = $region13
    $region12: #{tpu_custom_call.1} parent=1 // pred_region
      %48 = dma.done [#allocation3], 256
    $region13: #{tpu_custom_call.1} parent=1 // pred_fallthru
      _
    // Predicated region
    $region14: #{tpu_custom_call.1} parent=1 // pred_check
      _
    $region15: #{tpu_custom_call.1} parent=1 // pred_check_branch
      %50 = sbr.rel (0) target = $region17
    $region16: #{tpu_custom_call.1} parent=1 // pred_region
      %51 = dma.done [#allocation6], 256
    $region17: #{tpu_custom_call.1} parent=1 // pred_fallthru
      _
    %s52 = sadd.s32 0, 0
    %p53 = scmp.lt.s32.totalorder %s52, 0
    %s54 = scalar_select %p53, %s52, 0
    %s55 = smul.u32 2, %s54
    %s56 = sadd.s32 0, 0
    %p57 = scmp.lt.s32.totalorder %s56, 0
    %s58 = scalar_select %p57, %s56, 0
    %s59 = smul.u32 2, %s58
    %p60 = scmp.eq.s32.totalorder 0, 0
    // Predicated region
    $region18: #{tpu_custom_call.1} parent=1 // pred_check
      %p61 = pneg %p60
    $region19: #{tpu_custom_call.1} parent=1 // pred_check_branch
      %63 = sbr.rel (%p61) target = $region21
    $region20: #{tpu_custom_call.1} parent=1 // pred_region
      %64 = vst [vmem:[#allocation7] sm:$0xff] 0.0
      %65 = vst [vmem:[#allocation7 + $0x8] sm:$0xff] 0.0
      %66 = vst [vmem:[#allocation7 + $0x10] sm:$0xff] 0.0
    $region21: #{tpu_custom_call.1} parent=1 // pred_fallthru
      _
    %v67 = vld [vmem:[#allocation2] sm:$0xff]
    %v68 = vld [vmem:[#allocation2 + $0x8] sm:$0xff]
    %v69 = vld [vmem:[#allocation5] sm:$0xff]
    %v70 = vld [vmem:[#allocation5 + $0x8] sm:$0xff]
    %v71 = vmul.f32 %v67, %v69
    %v72 = vmul.f32 %v68, %v70
    %v73 = vmul.f32 %v67, %v67
    %v74 = vmul.f32 %v68, %v68
    %v75 = vmul.f32 %v69, %v69
    %v76 = vmul.f32 %v70, %v70
    %v77 = vadd.f32 %v71, %v72
    %v78 = vadd.f32 %v77, 0.0
    %v79 = vadd.f32 %v73, %v74
    %v80 = vadd.f32 %v79, 0.0
    %v81 = vadd.f32 %v75, %v76
    %v82 = vadd.f32 %v81, 0.0
    %v83 = vld [vmem:[#allocation7] sm:$0xff]
    %v84 = vadd.f32 %v83, %v78
    %85 = vst [vmem:[#allocation7] sm:$0xff] %v84
    %s86 = scalar_lea.vmem [#allocation7], 8
    %v87 = vld [vmem:[%s86] sm:$0xff]
    %v88 = vadd.f32 %v87, %v80
    %89 = vst [vmem:[%s86] sm:$0xff] %v88
    %s90 = scalar_lea.vmem [#allocation7], 16
    %v91 = vld [vmem:[%s90] sm:$0xff]
    %v92 = vadd.f32 %v91, %v82
    %93 = vst [vmem:[%s90] sm:$0xff] %v92
    // Predicated region
    $region22: #{tpu_custom_call.1} parent=1 // pred_check
      _
    $region23: #{tpu_custom_call.1} parent=1 // pred_check_branch
      %95 = sbr.rel (0) target = $region25
    $region24: #{tpu_custom_call.1} parent=1 // pred_region
      %s97 = ssub.s32 384, 384
      %98 = vsyncadd [#allocation4], %s97
      %s99 = sshll.u32 [#allocation7], 4
      %s100 = int_to_ptr.vmem [resolvable:$true] %s99
      %105 = dma.vmem_to_hbm [thread:$0]  %s100, 384, %s2, [#allocation4], 128, 128, 8
    $region25: #{tpu_custom_call.1} parent=1 // pred_fallthru
      _
    // Predicated region
    $region26: #{tpu_custom_call.1} parent=1 // pred_check
      _
    $region27: #{tpu_custom_call.1} parent=1 // pred_check_branch
      %107 = sbr.rel (0) target = $region29
    $region28: #{tpu_custom_call.1} parent=1 // pred_region
      %108 = dma.done [#allocation4], 384
    $region29: #{tpu_custom_call.1} parent=1 // pred_fallthru
      _
    %109 = vsyncpa [#allocation3], 1
    %110 = vsyncpa [#allocation6], 1
    %111 = vsyncpa [#allocation4], 1

</llo_original>
